<compile_context>
chip_gen: v7x
topology: tpu7x:2x2x1
jax: 0.10.0
libtpu: 0.0.40
codegen_flags: <defaults>
</compile_context>

<pallas_src>
import functools

import numpy as np
import jax
import jax.numpy as jnp
from jax.experimental import pallas as pl
from jax.experimental.pallas import tpu as pltpu

LANE = 128     # lane width (last dim of every block)
SUBLANE = 8    # sublane granularity (second-to-last block dim multiple)

true_params = np.array(
    [0.285311, 0.384, 0.151, 0.017, 0.008, 55.0, 8.0, 5.0, 0.6, 2.0]
)

# param index layout (matches the reference module's implied indices)
IDX_MU = 0
IDX_BLE_WEIGHTS = 1      # 4 weights
IDX_BLE_THRESH = 5       # 3 residual thresholds
IDX_CON_WEIGHTS = 8      # 2 weights


# --------------------------------------------------------------------------
# kernel
# --------------------------------------------------------------------------
def _covid_hard_kernel(params_ref, tau_ref, a_ref, c_ref, out_ref):
    # ---- scalar params from SMEM --------------------------------------------
    w0 = params_ref[IDX_BLE_WEIGHTS + 0]
    w1 = params_ref[IDX_BLE_WEIGHTS + 1]
    w2 = params_ref[IDX_BLE_WEIGHTS + 2]
    w3 = params_ref[IDX_BLE_WEIGHTS + 3]
    t0 = params_ref[IDX_BLE_THRESH + 0]
    t1 = t0 + params_ref[IDX_BLE_THRESH + 1]
    t2 = t1 + params_ref[IDX_BLE_THRESH + 2]
    # fold -mu into the infectiousness weights (scalar work only; saves one
    # vector multiply and the negate per vreg)
    neg_mu = -params_ref[IDX_MU]
    wc2 = neg_mu * params_ref[IDX_CON_WEIGHTS + 0]
    wc3 = neg_mu * params_ref[IDX_CON_WEIGHTS + 1]

    # ---- event columns, each a dense (block_rows, 128) tile ------------------
    tau = tau_ref[...]
    a = a_ref[...]
    c = c_ref[...]

    # f_ble: exhaustive, mutually-exclusive bins -> nested select is exact
    f_ble = jnp.where(
        a <= t0, w0,
        jnp.where(a <= t1, w1, jnp.where(a <= t2, w2, w3)),
    )
    # f_con with -mu folded in: zero unless c == 2 or c == 3.
    # Padded entries have c == 0 -> f_con == 0 -> out == 0 (sliced off);
    # garbage rows in a ragged last block never get written back anyway.
    f_con = jnp.where(c == 2.0, wc2, jnp.where(c == 3.0, wc3, 0.0))

    # out = 1 - exp(-mu * tau * f_ble * f_con_raw)
    # NOTE: -jnp.expm1(x) would be numerically tighter for tiny products; kept
    # as 1 - exp(x) to match the PyTorch reference formula exactly (f32 abs
    # error here is <~1.2e-7, well inside the test tolerance).
    out_ref[...] = 1.0 - jnp.exp(tau * f_ble * f_con)


# --------------------------------------------------------------------------
# tiling plan helpers
# --------------------------------------------------------------------------
def _cdiv(a, b):
    return -(-a // b)


def _round_up(x, m):
    return _cdiv(x, m) * m


def _default_block_rows():
    # v6e / v7x: 4096-row tiles -> 3 in + 1 out f32 blocks = 8 MiB/step,
    # 16 MiB double-buffered, inside their 32 MiB scoped-VMEM default, and
    # halves per-step overhead at >= 1.4 TB/s HBM.
    # v5e (16 MiB scoped default) and unknown chips: stay at 2048 (8 MiB).
    try:
        kind = jax.devices()[0].device_kind.lower().replace(" ", "")
    except Exception:  # pragma: no cover - defensive
        return 2048
    if "v6" in kind or "v7" in kind or "tpu7" in kind:
        return 4096
    return 2048


def _plan_blocks(rows, block_rows):
    """Pick (block_rows, grid) obeying the (8,128) block rule.

    The last block is allowed to be ragged (no padding of `rows`); for any
    non-trivial input we force >= 2 grid steps (best-effort even) so the
    'parallel' axis can split across v7x's two TensorCores.
    """
    if rows < 2 * SUBLANE:
        return rows, 1                      # single full-extent block (always legal)
    block_rows = max(SUBLANE, _round_up(block_rows, SUBLANE))
    br = min(block_rows, _round_up(_cdiv(rows, 2), SUBLANE))   # >= 2 steps
    grid = _cdiv(rows, br)
    if grid > 2 and grid % 2 == 1:          # best-effort even grid
        br2 = max(SUBLANE, _round_up(_cdiv(rows, grid + 1), SUBLANE))
        grid2 = _cdiv(rows, br2)
        if grid2 % 2 == 0:
            br, grid = br2, grid2
    return br, grid


# --------------------------------------------------------------------------
# wrappers
# --------------------------------------------------------------------------
@functools.partial(jax.jit, static_argnames=("block_rows",))
def covid_hard_forward_soa(params, tau, a, c, *, block_rows=None):
    """Fast path: SoA event columns tau / a / c, each shape (N,) -> (N,) probs.

    Zero wrapper-side HBM copies when N is a multiple of 128 (the
    (N,) -> (rows, 128) reshape is a free bitcast); otherwise one pad-to-128
    copy per column is paid.
    """
    params = jnp.asarray(params, jnp.float32)
    tau = jnp.asarray(tau, jnp.float32)
    a = jnp.asarray(a, jnp.float32)
    c = jnp.asarray(c, jnp.float32)
    n = tau.shape[0]
    if block_rows is None:
        block_rows = _default_block_rows()

    rows = max(1, _cdiv(n, LANE))
    n_pad = rows * LANE
    if n_pad != n:
        # TODO(synk): a 128-aligned SoA producer removes this pad (a full HBM
        # copy of each column); the aligned path is fully zero-copy.
        pad = (0, n_pad - n)
        tau = jnp.pad(tau, pad)
        a = jnp.pad(a, pad)
        c = jnp.pad(c, pad)
    tau2 = tau.reshape(rows, LANE)
    a2 = a.reshape(rows, LANE)
    c2 = c.reshape(rows, LANE)

    br, grid = _plan_blocks(rows, block_rows)
    col_spec = pl.BlockSpec((br, LANE), lambda i: (i, 0))

    out = pl.pallas_call(
        _covid_hard_kernel,
        out_shape=jax.ShapeDtypeStruct((rows, LANE), jnp.float32),
        grid=(grid,),
        in_specs=[
            # 10 scalar params, resident in SMEM
            pl.BlockSpec(memory_space=pltpu.MemorySpace.SMEM),
            col_spec,   # tau
            col_spec,   # a
            col_spec,   # c
        ],
        out_specs=pl.BlockSpec((br, LANE), lambda i: (i, 0)),
        compiler_params=pltpu.CompilerParams(
            dimension_semantics=("parallel",),
        ),
    )(params, tau2, a2, c2)
    return out.reshape(n_pad)[:n]


@jax.jit
def covid_hard_forward(params, events):
    """Module-compatible entry point: events is (N, 3) AoS rows (tau, a, c).

    This legacy path pays one AoS->SoA column-split pass over `events`
    (~24 B/event of HBM traffic) before the kernel; producers that already
    hold the columns should call `covid_hard_forward_soa` (zero-copy).
    """
    events = jnp.asarray(events, jnp.float32)
    return covid_hard_forward_soa(
        params, events[:, 0], events[:, 1], events[:, 2]
    )


def covid_hard_ref(params, events):
    """Pure-JAX reference of Q_j_hard_single for verification."""
    params = jnp.asarray(params, jnp.float32)
    events = jnp.asarray(events, jnp.float32)
    tau, a, c = events[:, 0], events[:, 1], events[:, 2]
    mu = params[IDX_MU]
    w = params[IDX_BLE_WEIGHTS:IDX_BLE_WEIGHTS + 4]
    t = params[IDX_BLE_THRESH:IDX_BLE_THRESH + 3]
    t_abs = jnp.array([t[0], t[0] + t[1], t[0] + t[1] + t[2]])
    wc = params[IDX_CON_WEIGHTS:IDX_CON_WEIGHTS + 2]
    f_ble = jnp.where(
        a <= t_abs[0], w[0],
        jnp.where(a <= t_abs[1], w[1], jnp.where(a <= t_abs[2], w[2], w[3])),
    )
    f_con = jnp.where(c == 2.0, wc[0], jnp.where(c == 3.0, wc[1], 0.0))
    r_n = tau * f_ble * f_con
    return 1.0 - jnp.exp(-mu * r_n)


def _make_event_columns(key, n):
    k_tau, k_a, k_c = jax.random.split(key, 3)
    tau = jax.random.uniform(k_tau, (n,), minval=1.0, maxval=15.0)
    a = jax.random.uniform(k_a, (n,), minval=40.0, maxval=80.0)
    c = jax.random.randint(k_c, (n,), 1, 5).astype(jnp.float32)  # {1..4}
    return tau, a, c


if __name__ == "__main__":
    # Deterministic parameter init (mirrors __init__: true_params + |N(0, 0.1)|).
    rng = np.random.default_rng(0)
    init_params = (true_params + np.abs(rng.normal(0.0, 0.1, size=10))).astype(
        np.float32
    )
    params = jnp.asarray(init_params)

    key = jax.random.PRNGKey(0)
    k1, k2, k3 = jax.random.split(key, 3)

    # 1) Module-compatible AoS path at a small shape (N=8): exercises the
    #    single-block fast path + the legacy column-split wrapper.
    tau_s, a_s, c_s = _make_event_columns(k1, 8)
    events_small = jnp.stack([tau_s, a_s, c_s], axis=1)          # (8, 3)
    out_small = jax.block_until_ready(covid_hard_forward(params, events_small))
    assert out_small.shape == (8,)
    np.testing.assert_allclose(
        np.asarray(out_small),
        np.asarray(covid_hard_ref(params, events_small)),
        rtol=1e-5, atol=1e-6,
    )

    # 2) SoA fast path, 128-aligned N (zero wrapper-side HBM copies).
    tau_m, a_m, c_m = _make_event_columns(k2, 1024)
    out_m = jax.block_until_ready(covid_hard_forward_soa(params, tau_m, a_m, c_m))
    events_m = jnp.stack([tau_m, a_m, c_m], axis=1)
    assert out_m.shape == (1024,)
    np.testing.assert_allclose(
        np.asarray(out_m),
        np.asarray(covid_hard_ref(params, events_m)),
        rtol=1e-5, atol=1e-6,
    )

    # 3) SoA path, non-aligned N with a tiny block override: exercises the
    #    multi-step grid with a ragged (masked) last block.
    tau_b, a_b, c_b = _make_event_columns(k3, 5000)
    out_b = jax.block_until_ready(
        covid_hard_forward_soa(params, tau_b, a_b, c_b, block_rows=16)
    )
    events_b = jnp.stack([tau_b, a_b, c_b], axis=1)
    assert out_b.shape == (5000,)
    np.testing.assert_allclose(
        np.asarray(out_b),
        np.asarray(covid_hard_ref(params, events_b)),
        rtol=1e-5, atol=1e-6,
    )

    print("KERNEL_OK")
</pallas_src>

<mosaic_0001>
module attributes {stable_mosaic.version = 11 : i64} {
  func.func @_covid_hard_kernel(%arg0: i32, %arg1: memref<10xf32, #tpu.memory_space<smem>>, %arg2: memref<1x128xf32, #tpu.memory_space<vmem>>, %arg3: memref<1x128xf32, #tpu.memory_space<vmem>>, %arg4: memref<1x128xf32, #tpu.memory_space<vmem>>, %arg5: memref<1x128xf32, #tpu.memory_space<vmem>>) attributes {dimension_semantics = [#tpu.dimension_semantics<parallel>], iteration_bounds = array<i64: 1>, scalar_prefetch = 0 : i64, scratch_operands = 0 : i64, tpu.core_type = #tpu.core_type<tc>, window_params = [{transform_indices = @transform_0, window_bounds = array<i64: 10>}, {transform_indices = @transform_1, window_bounds = array<i64: 1, 128>}, {transform_indices = @transform_2, window_bounds = array<i64: 1, 128>}, {transform_indices = @transform_3, window_bounds = array<i64: 1, 128>}, {transform_indices = @transform_4, window_bounds = array<i64: 1, 128>}]} {
    %c1 = arith.constant 1 : index
    %0 = memref.load %arg1[%c1] : memref<10xf32, #tpu.memory_space<smem>>
    %c2 = arith.constant 2 : index
    %1 = memref.load %arg1[%c2] : memref<10xf32, #tpu.memory_space<smem>>
    %c3 = arith.constant 3 : index
    %2 = memref.load %arg1[%c3] : memref<10xf32, #tpu.memory_space<smem>>
    %c4 = arith.constant 4 : index
    %3 = memref.load %arg1[%c4] : memref<10xf32, #tpu.memory_space<smem>>
    %c5 = arith.constant 5 : index
    %4 = memref.load %arg1[%c5] : memref<10xf32, #tpu.memory_space<smem>>
    %c6 = arith.constant 6 : index
    %5 = memref.load %arg1[%c6] : memref<10xf32, #tpu.memory_space<smem>>
    %6 = arith.addf %4, %5 : f32
    %c7 = arith.constant 7 : index
    %7 = memref.load %arg1[%c7] : memref<10xf32, #tpu.memory_space<smem>>
    %8 = arith.addf %6, %7 : f32
    %c0 = arith.constant 0 : index
    %9 = memref.load %arg1[%c0] : memref<10xf32, #tpu.memory_space<smem>>
    %cst = arith.constant 0.000000e+00 : f32
    %10 = arith.subf %cst, %9 : f32
    %c8 = arith.constant 8 : index
    %11 = memref.load %arg1[%c8] : memref<10xf32, #tpu.memory_space<smem>>
    %12 = arith.mulf %10, %11 : f32
    %c9 = arith.constant 9 : index
    %13 = memref.load %arg1[%c9] : memref<10xf32, #tpu.memory_space<smem>>
    %14 = arith.mulf %10, %13 : f32
    %c0_0 = arith.constant 0 : index
    %c0_1 = arith.constant 0 : index
    %15 = vector.load %arg2[%c0_0, %c0_1] : memref<1x128xf32, #tpu.memory_space<vmem>>, vector<1x128xf32>
    %c0_2 = arith.constant 0 : index
    %c0_3 = arith.constant 0 : index
    %16 = vector.load %arg3[%c0_2, %c0_3] : memref<1x128xf32, #tpu.memory_space<vmem>>, vector<1x128xf32>
    %c0_4 = arith.constant 0 : index
    %c0_5 = arith.constant 0 : index
    %17 = vector.load %arg4[%c0_4, %c0_5] : memref<1x128xf32, #tpu.memory_space<vmem>>, vector<1x128xf32>
    %18 = vector.broadcast %4 : f32 to vector<1x128xf32>
    %19 = arith.cmpf ole, %16, %18 : vector<1x128xf32>
    %20 = vector.broadcast %6 : f32 to vector<1x128xf32>
    %21 = arith.cmpf ole, %16, %20 : vector<1x128xf32>
    %22 = vector.broadcast %8 : f32 to vector<1x128xf32>
    %23 = arith.cmpf ole, %16, %22 : vector<1x128xf32>
    %24 = vector.broadcast %2 : f32 to vector<1x128xf32>
    %25 = vector.broadcast %3 : f32 to vector<1x128xf32>
    %26 = arith.select %23, %24, %25 : vector<1x128xi1>, vector<1x128xf32>
    %27 = vector.broadcast %1 : f32 to vector<1x128xf32>
    %28 = arith.select %21, %27, %26 : vector<1x128xi1>, vector<1x128xf32>
    %29 = vector.broadcast %0 : f32 to vector<1x128xf32>
    %30 = arith.select %19, %29, %28 : vector<1x128xi1>, vector<1x128xf32>
    %cst_6 = arith.constant 2.000000e+00 : f32
    %31 = vector.broadcast %cst_6 : f32 to vector<1x128xf32>
    %32 = arith.cmpf oeq, %17, %31 : vector<1x128xf32>
    %cst_7 = arith.constant 3.000000e+00 : f32
    %33 = vector.broadcast %cst_7 : f32 to vector<1x128xf32>
    %34 = arith.cmpf oeq, %17, %33 : vector<1x128xf32>
    %cst_8 = arith.constant 0.000000e+00 : f32
    %35 = vector.broadcast %14 : f32 to vector<1x128xf32>
    %36 = vector.broadcast %cst_8 : f32 to vector<1x128xf32>
    %37 = arith.select %34, %35, %36 : vector<1x128xi1>, vector<1x128xf32>
    %38 = vector.broadcast %12 : f32 to vector<1x128xf32>
    %39 = arith.select %32, %38, %37 : vector<1x128xi1>, vector<1x128xf32>
    %40 = arith.mulf %15, %30 : vector<1x128xf32>
    %41 = arith.mulf %40, %39 : vector<1x128xf32>
    %42 = math.exp %41 : vector<1x128xf32>
    %cst_9 = arith.constant 1.000000e+00 : f32
    %43 = vector.broadcast %cst_9 : f32 to vector<1x128xf32>
    %44 = arith.subf %43, %42 : vector<1x128xf32>
    %c0_10 = arith.constant 0 : index
    %c0_11 = arith.constant 0 : index
    %45 = vector.load %arg5[%c0_10, %c0_11] : memref<1x128xf32, #tpu.memory_space<vmem>>, vector<1x128xf32>
    tpu.vector_store %arg5[%c0_10, %c0_11], %44 {strides = array<i32>} : memref<1x128xf32, #tpu.memory_space<vmem>>, vector<1x128xf32>,
    return
  }
  func.func @transform_0(%arg0: i32) -> i32 {
    %c0_i32 = arith.constant 0 : i32
    %c0_i32_0 = arith.constant 0 : i32
    return %c0_i32 : i32
  }
  func.func @transform_1(%arg0: i32) -> (i32, i32) {
    %c0_i32 = arith.constant 0 : i32
    %c0_i32_0 = arith.constant 0 : i32
    return %arg0, %c0_i32 : i32, i32
  }
  func.func @transform_2(%arg0: i32) -> (i32, i32) {
    %c0_i32 = arith.constant 0 : i32
    %c0_i32_0 = arith.constant 0 : i32
    return %arg0, %c0_i32 : i32, i32
  }
  func.func @transform_3(%arg0: i32) -> (i32, i32) {
    %c0_i32 = arith.constant 0 : i32
    %c0_i32_0 = arith.constant 0 : i32
    return %arg0, %c0_i32 : i32, i32
  }
  func.func @transform_4(%arg0: i32) -> (i32, i32) {
    %c0_i32 = arith.constant 0 : i32
    %c0_i32_0 = arith.constant 0 : i32
    return %arg0, %c0_i32 : i32, i32
  }
}

</mosaic_0001>

<llo_original>
// kernel: covid_hard_forward_soa.1
$region0: #{covid_hard_forward_soa.1}
  #allocation0 [shape = 'u32[]', space=smem, size = 0x4, offset = 0x4, fixed_abs, tag = 'smem constant byte address 0x4 - core index']
  #allocation1 [shape = 'u32[144,128]{1,0:T(1,128)}', space=vmem, size = 0x12000, scoped, tag = 'internal scratch']
  %s0 = inlined_call_operand.vmem [shape: f32[10], index: 0, kind: input, shape index: {}]
  %s1 = inlined_call_operand.vmem [shape: f32[1,128], index: 1, kind: input, shape index: {}]
  %s2 = inlined_call_operand.vmem [shape: f32[1,128], index: 2, kind: input, shape index: {}]
  %s3 = inlined_call_operand.vmem [shape: f32[1,128], index: 3, kind: input, shape index: {}]
  %s4 = inlined_call_operand.vmem [shape: f32[1,128], index: 4, kind: output, shape index: {}]
  %s5 = sld [smem:[#allocation0]]
  $region30: #{covid_hard_forward_soa.1} parent=0
    _
  %s7 = ssub.s32 1, %s5
  %s8 = scalar_select 0, %s7, %s5
  $region1: #{covid_hard_forward_soa.1} parent=0
    #allocation2 [shape = 'u8[512]{0}', space=smem, size = 0x200, scoped, tag = 'input window, operand 0, single buffered']
    #allocation3 [shape = 's32[1]{0}', space=sflag, size = 0x4, scoped, tag = 'scoped memory for covid_hard_forward_soa.1']
    %9 = vsyncpa [#allocation3], 0
    // Predicated region
    $region2: #{covid_hard_forward_soa.1} parent=1 // pred_check
      _
    $region3: #{covid_hard_forward_soa.1} parent=1 // pred_check_branch
      %11 = sbr.rel (0) target = $region5
    $region4: #{covid_hard_forward_soa.1} parent=1 // pred_region
      %s13 = ssub.s32 16, 16
      %14 = vsyncadd [#allocation3], %s13
      %s16 = sshll.u32 %s0, 4
      %s17 = int_to_ptr.vmem [resolvable:$true] %s16
      %19 = dma.vmem_to_smem %s17, 16, [#allocation2], [#allocation3]
    $region5: #{covid_hard_forward_soa.1} parent=1 // pred_fallthru
      _
    // Predicated region
    $region6: #{covid_hard_forward_soa.1} parent=1 // pred_check
      _
    $region7: #{covid_hard_forward_soa.1} parent=1 // pred_check_branch
      %21 = sbr.rel (0) target = $region9
    $region8: #{covid_hard_forward_soa.1} parent=1 // pred_region
      _
    $region9: #{covid_hard_forward_soa.1} parent=1 // pred_fallthru
      _
    // Predicated region
    $region10: #{covid_hard_forward_soa.1} parent=1 // pred_check
      _
    $region11: #{covid_hard_forward_soa.1} parent=1 // pred_check_branch
      %23 = sbr.rel (0) target = $region13
    $region12: #{covid_hard_forward_soa.1} parent=1 // pred_region
      _
    $region13: #{covid_hard_forward_soa.1} parent=1 // pred_fallthru
      _
    // Predicated region
    $region14: #{covid_hard_forward_soa.1} parent=1 // pred_check
      _
    $region15: #{covid_hard_forward_soa.1} parent=1 // pred_check_branch
      %25 = sbr.rel (0) target = $region17
    $region16: #{covid_hard_forward_soa.1} parent=1 // pred_region
      _
    $region17: #{covid_hard_forward_soa.1} parent=1 // pred_fallthru
      _
    // Predicated region
    $region18: #{covid_hard_forward_soa.1} parent=1 // pred_check
      _
    $region19: #{covid_hard_forward_soa.1} parent=1 // pred_check_branch
      %27 = sbr.rel (0) target = $region21
    $region20: #{covid_hard_forward_soa.1} parent=1 // pred_region
      %28 = dma.done [#allocation3], 16
    $region21: #{covid_hard_forward_soa.1} parent=1 // pred_fallthru
      _
    %29 = sfence
    %s30 = sld [smem:[#allocation2 + $0x1]]
    %s31 = sld [smem:[#allocation2 + $0x2]]
    %s32 = sld [smem:[#allocation2 + $0x3]]
    %s33 = sld [smem:[#allocation2 + $0x4]]
    %s34 = sld [smem:[#allocation2 + $0x5]]
    %s35 = sld [smem:[#allocation2 + $0x6]]
    %s36 = sadd.f32 %s34, %s35
    %s37 = sld [smem:[#allocation2 + $0x7]]
    %s38 = sadd.f32 %s36, %s37
    %s39 = sld [smem:[#allocation2]]
    %s40 = ssub.f32 0.0, %s39
    %s41 = sld [smem:[#allocation2 + $0x8]]
    %s42 = smul.f32 %s40, %s41
    %s43 = sld [smem:[#allocation2 + $0x9]]
    %s44 = smul.f32 %s40, %s43
    %v45 = vld [vmem:[%s1] sm:$0x1]
    %v46 = vld [vmem:[%s2] sm:$0x1]
    %v47 = vld [vmem:[%s3] sm:$0x1]
    %v48 = vstv %s34
    %vm49 = vcmp.le.f32.partialorder %v46, %v48
    %v50 = vstv %s36
    %vm51 = vcmp.le.f32.partialorder %v46, %v50
    %v52 = vstv %s38
    %vm53 = vcmp.le.f32.partialorder %v46, %v52
    %v54 = vstv %s32
    %v55 = vstv %s33
    %v56 = vsel %vm53, %v54, %v55
    %v57 = vstv %s31
    %v58 = vsel %vm51, %v57, %v56
    %v59 = vstv %s30
    %v60 = vsel %vm49, %v59, %v58
    %vm61 = vcmp.eq.f32.partialorder %v47, 2.0
    %vm62 = vcmp.eq.f32.partialorder %v47, 3.0
    %v63 = vstv %s44
    %v64 = vsel %vm62, %v63, 0.0
    %v65 = vstv %s42
    %v66 = vsel %vm61, %v65, %v64
    %v67 = vmul.f32 %v45, %v60
    %v68 = vmul.f32 %v67, %v66
    %v69 = vmul.f32 %v68, 1.442695
    %v70 = vpow.pop %v69
    %v71 = vsub.f32 1.0, %v70
    %72 = vst [vmem:[%s4] sm:$0x1] %v71
    // Predicated region
    $region22: #{covid_hard_forward_soa.1} parent=1 // pred_check
      _
    $region23: #{covid_hard_forward_soa.1} parent=1 // pred_check_branch
      %74 = sbr.rel (0) target = $region25
    $region24: #{covid_hard_forward_soa.1} parent=1 // pred_region
      _
    $region25: #{covid_hard_forward_soa.1} parent=1 // pred_fallthru
      _
    // Predicated region
    $region26: #{covid_hard_forward_soa.1} parent=1 // pred_check
      _
    $region27: #{covid_hard_forward_soa.1} parent=1 // pred_check_branch
      %76 = sbr.rel (0) target = $region29
    $region28: #{covid_hard_forward_soa.1} parent=1 // pred_region
      _
    $region29: #{covid_hard_forward_soa.1} parent=1 // pred_fallthru
      _
    %77 = vsyncpa [#allocation3], 1

</llo_original>
